<compile_context>
chip_gen: v6e
topology: v6e:2x2x1
jax: 0.10.0
libtpu: 0.0.40
codegen_flags: <defaults>
</compile_context>

<pallas_src>
import functools

import jax
import jax.numpy as jnp
from jax.experimental import pallas as pl
from jax.experimental.pallas import tpu as pltpu

# ---- cfg (deterministic, in-script; mirrors cfg.MODEL.ROI_ATTRIBUTE_HEAD.*) ----
MAX_NUM_ATTR_PER_IMG = 8      # cfg.MODEL.ROI_ATTRIBUTE_HEAD.MAX_NUM_ATTR_PER_IMG
MAX_NUM_ATTR_PER_OBJ = 4      # cfg.MODEL.ROI_ATTRIBUTE_HEAD.MAX_NUM_ATTR_PER_OBJ
ATTR_THRESH = 0.05            # cfg.MODEL.ROI_ATTRIBUTE_HEAD.POSTPROCESS_ATTRIBUTES_THRESHOLD
OUTPUT_FEATURE = True         # cfg.TEST.OUTPUT_ATTRIBUTE_FEATURE

_OUT_W = 128                  # lane-dense width of the packed top-k/count output
_NEG = -1e30                  # effectively -inf for masked class-padding lanes


def _round_up(a, b):
    return (a + b - 1) // b * b


# ------------------------------ fused kernel ---------------------------------
def _fused_attr_kernel(x_ref, scores_ref, slab_ref, *, c_real, k):
    x = x_ref[...].astype(jnp.float32)                       # (tile_n, c_pad)
    tile_n, c_pad = x.shape
    col = jax.lax.broadcasted_iota(jnp.int32, (tile_n, c_pad), 1)
    valid = col < c_real                                     # real class lanes

    # class-axis padding lanes must not take part in the softmax
    x = jnp.where(valid, x, _NEG)

    # softmax(x, -1); divide done as reciprocal + multiply
    m = jnp.max(x, axis=-1, keepdims=True)
    e = jnp.exp(x - m)
    inv = pl.reciprocal(jnp.sum(e, axis=-1, keepdims=True), approx=False)
    p = e * inv

    p = jnp.where(col == 0, 0.0, p)                          # scores[:, 0] = 0.0
    mask = p > ATTR_THRESH                                   # inds_all
    s = jnp.where(mask, p, 0.0)                              # scores[~inds_all] = 0.0
    scores_ref[...] = s

    cnt = jnp.sum(mask.astype(jnp.float32), axis=-1, keepdims=True)  # per-row dets

    # ---- exact per-row top-k: max + argmin-of-ties per extraction (XLU) ----
    # Values are bit-exact softmax outputs; ties break toward the lowest
    # column (torch.topk-compatible).  Padding lanes are pushed below every
    # real (>= 0) score so labels always land in [0, c_real).
    s_work = jnp.where(valid, s, -1.0)
    vals, idxs = [], []
    for step in range(k):
        v = jnp.max(s_work, axis=-1, keepdims=True)                       # (tile_n,1)
        idx = jnp.min(jnp.where(s_work == v, col, c_pad),
                      axis=-1, keepdims=True)                             # (tile_n,1)
        vals.append(v)
        idxs.append(idx)
        if step + 1 < k:
            s_work = jnp.where(col == idx, -1.0, s_work)    # drop the picked entry

    # lane-dense packed output: lanes [0,k) = values, [k,2k) = labels, [2k] = count
    lane = jax.lax.broadcasted_iota(jnp.int32, (tile_n, _OUT_W), 1)
    slab = jnp.zeros((tile_n, _OUT_W), jnp.float32)
    for j in range(k):
        slab = jnp.where(lane == j, vals[j], slab)
        slab = jnp.where(lane == k + j, idxs[j].astype(jnp.float32), slab)
    slab = jnp.where(lane == 2 * k, cnt, slab)
    slab_ref[...] = slab


def _run_fused(x_pad, tile_n, c_real):
    n_pad, c_pad = x_pad.shape
    kernel = functools.partial(_fused_attr_kernel, c_real=c_real,
                               k=MAX_NUM_ATTR_PER_OBJ)
    return pl.pallas_call(
        kernel,
        out_shape=(
            jax.ShapeDtypeStruct((n_pad, c_pad), jnp.float32),   # thresholded scores
            jax.ShapeDtypeStruct((n_pad, _OUT_W), jnp.float32),  # packed top-k slab
        ),
        grid=(n_pad // tile_n,),
        in_specs=[pl.BlockSpec((tile_n, c_pad), lambda i: (i, 0))],
        out_specs=(
            pl.BlockSpec((tile_n, c_pad), lambda i: (i, 0)),
            pl.BlockSpec((tile_n, _OUT_W), lambda i: (i, 0)),
        ),
        compiler_params=pltpu.CompilerParams(
            dimension_semantics=("parallel",)),                  # megacore on v7x
    )(x_pad)


# -------------------------------- wrapper -------------------------------------
@functools.partial(jax.jit, static_argnames=("boxes_per_image",))
def attribute_post_processor(x, features, boxes_per_image):
    """boxes_per_image: tuple of Python ints (static). Returns one dict per
    image with attr_labels / attr_scores (+ attr_feature) — stand-in for the
    BoxList extra fields."""
    n, c = x.shape
    k = MAX_NUM_ATTR_PER_OBJ

    c_pad = _round_up(c, 128)                    # lane-dense class axis
    n8 = _round_up(max(n, 1), 8)
    tile_n = n8 if n8 <= 1024 else 512           # >=512-row tiles ~ HBM roofline,
    n_pad = _round_up(n8, tile_n)                # well under 32 MiB scoped VMEM

    x_pad = jnp.zeros((n_pad, c_pad), jnp.float32).at[:n, :c].set(
        x.astype(jnp.float32))

    scores_pad, slab = _run_fused(x_pad, tile_n, c)

    results = []
    start = 0
    for n_i in boxes_per_image:
        sl = slab[start:start + n_i]
        attr_scores = sl[:, :k]
        # TODO(synk): torch returns int64 labels; int32 is used on TPU.
        attr_labels = sl[:, k:2 * k].astype(jnp.int32)
        num_det = jnp.sum(sl[:, 2 * k]).astype(jnp.int32)

        # Reference: torch.kthvalue(scores.flatten().cpu(), num_det - max + 1)
        # over the FULL per-image slab (zeros included), applied only when
        # num_det > max_num_attr.  Reproduced with an on-device sort.
        flat = jnp.sort(scores_pad[start:start + n_i, :c].reshape(-1))
        kth_idx = jnp.clip(num_det - MAX_NUM_ATTR_PER_IMG, 0, n_i * c - 1)
        kth_val = flat[kth_idx]
        if MAX_NUM_ATTR_PER_IMG > 0:
            t = jnp.where(num_det > MAX_NUM_ATTR_PER_IMG, kth_val,
                          jnp.float32(0.0))
        else:
            t = jnp.float32(0.0)
        # Applying the kth-value threshold to the already-extracted top-k
        # values yields the same attr_scores as thresholding before topk
        # (entries below t become 0 either way); labels of zero-score slots
        # may differ from torch's arbitrary tie order, which is semantically
        # irrelevant (score 0).
        attr_scores = jnp.where(attr_scores < t, 0.0, attr_scores)

        res = {"attr_labels": attr_labels, "attr_scores": attr_scores}
        if OUTPUT_FEATURE:
            # TODO(synk): BoxList bbox/size/extra-field bookkeeping not modeled.
            res["attr_feature"] = features[start:start + n_i]
        results.append(res)
        start += n_i
    return results


# ------------------------------- Main -----------------------------------------
if __name__ == "__main__":
    key = jax.random.PRNGKey(0)
    k1, k2 = jax.random.split(key)

    boxes_per_image = (5, 3)          # 2 images
    n_boxes = sum(boxes_per_image)    # 8
    num_classes = 16                  # attribute classes (class 0 = background)
    feat_dim = 32

    x = jax.random.normal(k1, (n_boxes, num_classes), dtype=jnp.float32)
    features = jax.random.normal(k2, (n_boxes, feat_dim), dtype=jnp.float32)

    results = attribute_post_processor(x, features,
                                       boxes_per_image=boxes_per_image)
    results = jax.block_until_ready(results)

    # sanity on shapes / dtypes
    assert results[0]["attr_labels"].shape == (5, MAX_NUM_ATTR_PER_OBJ)
    assert results[0]["attr_labels"].dtype == jnp.int32
    assert results[1]["attr_scores"].shape == (3, MAX_NUM_ATTR_PER_OBJ)
    assert results[0]["attr_feature"].shape == (5, feat_dim)

    print("KERNEL_OK")
</pallas_src>

<mosaic_0001>
module attributes {stable_mosaic.version = 11 : i64} {
  func.func @_fused_attr_kernel(%arg0: i32, %arg1: memref<8x128xf32, #tpu.memory_space<vmem>>, %arg2: memref<8x128xf32, #tpu.memory_space<vmem>>, %arg3: memref<8x128xf32, #tpu.memory_space<vmem>>) attributes {dimension_semantics = [#tpu.dimension_semantics<parallel>], iteration_bounds = array<i64: 1>, scalar_prefetch = 0 : i64, scratch_operands = 0 : i64, tpu.core_type = #tpu.core_type<tc>, window_params = [{transform_indices = @transform_0, window_bounds = array<i64: 8, 128>}, {transform_indices = @transform_1, window_bounds = array<i64: 8, 128>}, {transform_indices = @transform_2, window_bounds = array<i64: 8, 128>}]} {
    %c0 = arith.constant 0 : index
    %c0_0 = arith.constant 0 : index
    %0 = vector.load %arg1[%c0, %c0_0] : memref<8x128xf32, #tpu.memory_space<vmem>>, vector<8x128xf32>
    %1 = tpu.iota {dimensions = array<i32: 1>} : vector<8x128xi32>
    %c16_i32 = arith.constant 16 : i32
    %2 = vector.broadcast %c16_i32 : i32 to vector<8x128xi32>
    %3 = arith.cmpi slt, %1, %2 : vector<8x128xi32>
    %cst = arith.constant -1.000000e+30 : f32
    %4 = vector.broadcast %cst : f32 to vector<8x128xf32>
    %5 = arith.select %3, %0, %4 : vector<8x128xi1>, vector<8x128xf32>
    %cst_1 = arith.constant dense<0xFF800000> : vector<8xf32>
    %6 = vector.multi_reduction <maximumf>, %5, %cst_1 [1] : vector<8x128xf32> to vector<8xf32>
    %7 = vector.shape_cast %6 : vector<8xf32> to vector<8x1xf32>
    %8 = vector.broadcast %7 : vector<8x1xf32> to vector<8x128xf32>
    %9 = arith.subf %5, %8 : vector<8x128xf32>
    %10 = math.exp %9 : vector<8x128xf32>
    %cst_2 = arith.constant dense<0.000000e+00> : vector<8xf32>
    %11 = vector.multi_reduction <add>, %10, %cst_2 [1] : vector<8x128xf32> to vector<8xf32>
    %12 = vector.shape_cast %11 : vector<8xf32> to vector<8x1xf32>
    %13 = tpu.reciprocal %12 : vector<8x1xf32> -> vector<8x1xf32>
    %14 = vector.broadcast %13 : vector<8x1xf32> to vector<8x128xf32>
    %15 = arith.mulf %10, %14 : vector<8x128xf32>
    %c0_i32 = arith.constant 0 : i32
    %16 = vector.broadcast %c0_i32 : i32 to vector<8x128xi32>
    %17 = arith.cmpi eq, %1, %16 : vector<8x128xi32>
    %cst_3 = arith.constant 0.000000e+00 : f32
    %18 = vector.broadcast %cst_3 : f32 to vector<8x128xf32>
    %19 = arith.select %17, %18, %15 : vector<8x128xi1>, vector<8x128xf32>
    %cst_4 = arith.constant 5.000000e-02 : f32
    %20 = vector.broadcast %cst_4 : f32 to vector<8x128xf32>
    %21 = arith.cmpf ogt, %19, %20 : vector<8x128xf32>
    %cst_5 = arith.constant 0.000000e+00 : f32
    %22 = vector.broadcast %cst_5 : f32 to vector<8x128xf32>
    %23 = arith.select %21, %19, %22 : vector<8x128xi1>, vector<8x128xf32>
    %c0_6 = arith.constant 0 : index
    %c0_7 = arith.constant 0 : index
    %24 = vector.load %arg2[%c0_6, %c0_7] : memref<8x128xf32, #tpu.memory_space<vmem>>, vector<8x128xf32>
    tpu.vector_store %arg2[%c0_6, %c0_7], %23 {strides = array<i32>} : memref<8x128xf32, #tpu.memory_space<vmem>>, vector<8x128xf32>,
    %25 = arith.extui %21 : vector<8x128xi1> to vector<8x128xi32>
    %26 = arith.sitofp %25 : vector<8x128xi32> to vector<8x128xf32>
    %cst_8 = arith.constant dense<0.000000e+00> : vector<8xf32>
    %27 = vector.multi_reduction <add>, %26, %cst_8 [1] : vector<8x128xf32> to vector<8xf32>
    %28 = vector.shape_cast %27 : vector<8xf32> to vector<8x1xf32>
    %cst_9 = arith.constant -1.000000e+00 : f32
    %29 = vector.broadcast %cst_9 : f32 to vector<8x128xf32>
    %30 = arith.select %3, %23, %29 : vector<8x128xi1>, vector<8x128xf32>
    %cst_10 = arith.constant dense<0xFF800000> : vector<8xf32>
    %31 = vector.multi_reduction <maximumf>, %30, %cst_10 [1] : vector<8x128xf32> to vector<8xf32>
    %32 = vector.shape_cast %31 : vector<8xf32> to vector<8x1xf32>
    %33 = vector.broadcast %32 : vector<8x1xf32> to vector<8x128xf32>
    %34 = arith.cmpf oeq, %30, %33 : vector<8x128xf32>
    %c128_i32 = arith.constant 128 : i32
    %35 = vector.broadcast %c128_i32 : i32 to vector<8x128xi32>
    %36 = arith.select %34, %1, %35 : vector<8x128xi1>, vector<8x128xi32>
    %cst_11 = arith.constant dense<2147483647> : vector<8xi32>
    %37 = vector.multi_reduction <minsi>, %36, %cst_11 [1] : vector<8x128xi32> to vector<8xi32>
    %38 = vector.shape_cast %37 : vector<8xi32> to vector<8x1xi32>
    %39 = vector.broadcast %38 : vector<8x1xi32> to vector<8x128xi32>
    %40 = arith.cmpi eq, %1, %39 : vector<8x128xi32>
    %cst_12 = arith.constant -1.000000e+00 : f32
    %41 = vector.broadcast %cst_12 : f32 to vector<8x128xf32>
    %42 = arith.select %40, %41, %30 : vector<8x128xi1>, vector<8x128xf32>
    %cst_13 = arith.constant dense<0xFF800000> : vector<8xf32>
    %43 = vector.multi_reduction <maximumf>, %42, %cst_13 [1] : vector<8x128xf32> to vector<8xf32>
    %44 = vector.shape_cast %43 : vector<8xf32> to vector<8x1xf32>
    %45 = vector.broadcast %44 : vector<8x1xf32> to vector<8x128xf32>
    %46 = arith.cmpf oeq, %42, %45 : vector<8x128xf32>
    %c128_i32_14 = arith.constant 128 : i32
    %47 = vector.broadcast %c128_i32_14 : i32 to vector<8x128xi32>
    %48 = arith.select %46, %1, %47 : vector<8x128xi1>, vector<8x128xi32>
    %cst_15 = arith.constant dense<2147483647> : vector<8xi32>
    %49 = vector.multi_reduction <minsi>, %48, %cst_15 [1] : vector<8x128xi32> to vector<8xi32>
    %50 = vector.shape_cast %49 : vector<8xi32> to vector<8x1xi32>
    %51 = vector.broadcast %50 : vector<8x1xi32> to vector<8x128xi32>
    %52 = arith.cmpi eq, %1, %51 : vector<8x128xi32>
    %cst_16 = arith.constant -1.000000e+00 : f32
    %53 = vector.broadcast %cst_16 : f32 to vector<8x128xf32>
    %54 = arith.select %52, %53, %42 : vector<8x128xi1>, vector<8x128xf32>
    %cst_17 = arith.constant dense<0xFF800000> : vector<8xf32>
    %55 = vector.multi_reduction <maximumf>, %54, %cst_17 [1] : vector<8x128xf32> to vector<8xf32>
    %56 = vector.shape_cast %55 : vector<8xf32> to vector<8x1xf32>
    %57 = vector.broadcast %56 : vector<8x1xf32> to vector<8x128xf32>
    %58 = arith.cmpf oeq, %54, %57 : vector<8x128xf32>
    %c128_i32_18 = arith.constant 128 : i32
    %59 = vector.broadcast %c128_i32_18 : i32 to vector<8x128xi32>
    %60 = arith.select %58, %1, %59 : vector<8x128xi1>, vector<8x128xi32>
    %cst_19 = arith.constant dense<2147483647> : vector<8xi32>
    %61 = vector.multi_reduction <minsi>, %60, %cst_19 [1] : vector<8x128xi32> to vector<8xi32>
    %62 = vector.shape_cast %61 : vector<8xi32> to vector<8x1xi32>
    %63 = vector.broadcast %62 : vector<8x1xi32> to vector<8x128xi32>
    %64 = arith.cmpi eq, %1, %63 : vector<8x128xi32>
    %cst_20 = arith.constant -1.000000e+00 : f32
    %65 = vector.broadcast %cst_20 : f32 to vector<8x128xf32>
    %66 = arith.select %64, %65, %54 : vector<8x128xi1>, vector<8x128xf32>
    %cst_21 = arith.constant dense<0xFF800000> : vector<8xf32>
    %67 = vector.multi_reduction <maximumf>, %66, %cst_21 [1] : vector<8x128xf32> to vector<8xf32>
    %68 = vector.shape_cast %67 : vector<8xf32> to vector<8x1xf32>
    %69 = vector.broadcast %68 : vector<8x1xf32> to vector<8x128xf32>
    %70 = arith.cmpf oeq, %66, %69 : vector<8x128xf32>
    %c128_i32_22 = arith.constant 128 : i32
    %71 = vector.broadcast %c128_i32_22 : i32 to vector<8x128xi32>
    %72 = arith.select %70, %1, %71 : vector<8x128xi1>, vector<8x128xi32>
    %cst_23 = arith.constant dense<2147483647> : vector<8xi32>
    %73 = vector.multi_reduction <minsi>, %72, %cst_23 [1] : vector<8x128xi32> to vector<8xi32>
    %74 = vector.shape_cast %73 : vector<8xi32> to vector<8x1xi32>
    %75 = tpu.iota {dimensions = array<i32: 1>} : vector<8x128xi32>
    %cst_24 = arith.constant 0.000000e+00 : f32
    %76 = vector.broadcast %cst_24 : f32 to vector<8x128xf32>
    %c0_i32_25 = arith.constant 0 : i32
    %77 = vector.broadcast %c0_i32_25 : i32 to vector<8x128xi32>
    %78 = arith.cmpi eq, %75, %77 : vector<8x128xi32>
    %79 = vector.shape_cast %32 : vector<8x1xf32> to vector<8x1xf32>
    %80 = vector.broadcast %79 : vector<8x1xf32> to vector<8x128xf32>
    %81 = arith.select %78, %80, %76 : vector<8x128xi1>, vector<8x128xf32>
    %c4_i32 = arith.constant 4 : i32
    %82 = vector.broadcast %c4_i32 : i32 to vector<8x128xi32>
    %83 = arith.cmpi eq, %75, %82 : vector<8x128xi32>
    %84 = arith.sitofp %38 : vector<8x1xi32> to vector<8x1xf32>
    %85 = vector.shape_cast %84 : vector<8x1xf32> to vector<8x1xf32>
    %86 = vector.broadcast %85 : vector<8x1xf32> to vector<8x128xf32>
    %87 = arith.select %83, %86, %81 : vector<8x128xi1>, vector<8x128xf32>
    %c1_i32 = arith.constant 1 : i32
    %88 = vector.broadcast %c1_i32 : i32 to vector<8x128xi32>
    %89 = arith.cmpi eq, %75, %88 : vector<8x128xi32>
    %90 = vector.shape_cast %44 : vector<8x1xf32> to vector<8x1xf32>
    %91 = vector.broadcast %90 : vector<8x1xf32> to vector<8x128xf32>
    %92 = arith.select %89, %91, %87 : vector<8x128xi1>, vector<8x128xf32>
    %c5_i32 = arith.constant 5 : i32
    %93 = vector.broadcast %c5_i32 : i32 to vector<8x128xi32>
    %94 = arith.cmpi eq, %75, %93 : vector<8x128xi32>
    %95 = arith.sitofp %50 : vector<8x1xi32> to vector<8x1xf32>
    %96 = vector.shape_cast %95 : vector<8x1xf32> to vector<8x1xf32>
    %97 = vector.broadcast %96 : vector<8x1xf32> to vector<8x128xf32>
    %98 = arith.select %94, %97, %92 : vector<8x128xi1>, vector<8x128xf32>
    %c2_i32 = arith.constant 2 : i32
    %99 = vector.broadcast %c2_i32 : i32 to vector<8x128xi32>
    %100 = arith.cmpi eq, %75, %99 : vector<8x128xi32>
    %101 = vector.shape_cast %56 : vector<8x1xf32> to vector<8x1xf32>
    %102 = vector.broadcast %101 : vector<8x1xf32> to vector<8x128xf32>
    %103 = arith.select %100, %102, %98 : vector<8x128xi1>, vector<8x128xf32>
    %c6_i32 = arith.constant 6 : i32
    %104 = vector.broadcast %c6_i32 : i32 to vector<8x128xi32>
    %105 = arith.cmpi eq, %75, %104 : vector<8x128xi32>
    %106 = arith.sitofp %62 : vector<8x1xi32> to vector<8x1xf32>
    %107 = vector.shape_cast %106 : vector<8x1xf32> to vector<8x1xf32>
    %108 = vector.broadcast %107 : vector<8x1xf32> to vector<8x128xf32>
    %109 = arith.select %105, %108, %103 : vector<8x128xi1>, vector<8x128xf32>
    %c3_i32 = arith.constant 3 : i32
    %110 = vector.broadcast %c3_i32 : i32 to vector<8x128xi32>
    %111 = arith.cmpi eq, %75, %110 : vector<8x128xi32>
    %112 = vector.shape_cast %68 : vector<8x1xf32> to vector<8x1xf32>
    %113 = vector.broadcast %112 : vector<8x1xf32> to vector<8x128xf32>
    %114 = arith.select %111, %113, %109 : vector<8x128xi1>, vector<8x128xf32>
    %c7_i32 = arith.constant 7 : i32
    %115 = vector.broadcast %c7_i32 : i32 to vector<8x128xi32>
    %116 = arith.cmpi eq, %75, %115 : vector<8x128xi32>
    %117 = arith.sitofp %74 : vector<8x1xi32> to vector<8x1xf32>
    %118 = vector.shape_cast %117 : vector<8x1xf32> to vector<8x1xf32>
    %119 = vector.broadcast %118 : vector<8x1xf32> to vector<8x128xf32>
    %120 = arith.select %116, %119, %114 : vector<8x128xi1>, vector<8x128xf32>
    %c8_i32 = arith.constant 8 : i32
    %121 = vector.broadcast %c8_i32 : i32 to vector<8x128xi32>
    %122 = arith.cmpi eq, %75, %121 : vector<8x128xi32>
    %123 = vector.shape_cast %28 : vector<8x1xf32> to vector<8x1xf32>
    %124 = vector.broadcast %123 : vector<8x1xf32> to vector<8x128xf32>
    %125 = arith.select %122, %124, %120 : vector<8x128xi1>, vector<8x128xf32>
    %c0_26 = arith.constant 0 : index
    %c0_27 = arith.constant 0 : index
    %126 = vector.load %arg3[%c0_26, %c0_27] : memref<8x128xf32, #tpu.memory_space<vmem>>, vector<8x128xf32>
    tpu.vector_store %arg3[%c0_26, %c0_27], %125 {strides = array<i32>} : memref<8x128xf32, #tpu.memory_space<vmem>>, vector<8x128xf32>,
    return
  }
  func.func @transform_0(%arg0: i32) -> (i32, i32) {
    %c0_i32 = arith.constant 0 : i32
    %c0_i32_0 = arith.constant 0 : i32
    return %arg0, %c0_i32 : i32, i32
  }
  func.func @transform_1(%arg0: i32) -> (i32, i32) {
    %c0_i32 = arith.constant 0 : i32
    %c0_i32_0 = arith.constant 0 : i32
    return %arg0, %c0_i32 : i32, i32
  }
  func.func @transform_2(%arg0: i32) -> (i32, i32) {
    %c0_i32 = arith.constant 0 : i32
    %c0_i32_0 = arith.constant 0 : i32
    return %arg0, %c0_i32 : i32, i32
  }
}

</mosaic_0001>

<llo_original>
// kernel: attribute_post_processor.1
$region0: #{attribute_post_processor.1}
  #allocation0 [shape = 'u32[]', space=smem, size = 0x4, offset = 0x4, fixed_abs, tag = 'smem constant byte address 0x4 - core index']
  #allocation1 [shape = 'u32[144,128]{1,0:T(1,128)}', space=vmem, size = 0x12000, scoped, tag = 'internal scratch']
  %s0 = inlined_call_operand.vmem [shape: f32[8,128], index: 0, kind: input, shape index: {}]
  %s1 = inlined_call_operand.vmem [shape: f32[8,128], index: 1, kind: output, shape index: {0}]
  %s2 = inlined_call_operand.vmem [shape: f32[8,128], index: 2, kind: output, shape index: {1}]
  %3 = xla_tuple %s1, %s2
  %s4 = sld [smem:[#allocation0]]
  $region22: #{attribute_post_processor.1} parent=0
    _
  %s6 = ssub.s32 1, %s4
  %s7 = scalar_select 0, %s6, %s4
  // Predicated region
  $region2: #{attribute_post_processor.1} parent=0 // pred_check
    _
  $region3: #{attribute_post_processor.1} parent=0 // pred_check_branch
    %9 = sbr.rel (0) target = $region5
  $region4: #{attribute_post_processor.1} parent=0 // pred_region
    _
  $region5: #{attribute_post_processor.1} parent=0 // pred_fallthru
    _
  %v10 = vld [vmem:[%s0] sm:$0xff]
  %v11 = vlaneseq
  %v12 = vand.u32 %v11, 127
  %vm13 = vcmp.lt.s32.totalorder %v12, 16
  %v14 = vsel %vm13, %v10, -1e+30
  %15 = vmax.xlane.f32.xlu0 %v14
  %v16 = vpop.xlane.xlu0 %15
  %v17 = vsub.f32 %v14, %v16
  %v18 = vmul.f32 %v17, 1.442695
  %v19 = vpow.pop %v18
  %20 = vadd.xlane.f32.xlu0 %v19
  %v21 = vpop.xlane.xlu0 %20
  %v22 = vrcp.pop %v21
  %v23 = vmul.f32 %v19, %v22
  %vm24 = vcmp.eq.s32.totalorder %v12, 0
  %v25 = vsel %vm24, 0.0, %v23
  %vm26 = vcmp.gt.f32.partialorder %v25, 0.05
  %v27 = vsel %vm26, %v25, 0.0
  %28 = vst [vmem:[%s1] sm:$0xff] %v27
  %v29 = vsel %vm26, 1, 0
  %v30 = vcvt.s32.f32 %v29
  %31 = vadd.xlane.f32.xlu0 %v30
  %v32 = vpop.xlane.xlu0 %31
  %v33 = vsel %vm13, %v27, -1.0
  %34 = vmax.xlane.f32.xlu0 %v33
  %v35 = vpop.xlane.xlu0 %34
  %vm36 = vcmp.eq.f32.partialorder %v33, %v35
  %v37 = vsel %vm36, %v12, 128
  %v38 = vand.u32 %v37, 65535
  %v39 = vshra.s32 %v37, 16
  %v40 = vcvt.s32.f32 %v38
  %v41 = vcvt.s32.f32 %v39
  %42 = vmin.xlane.f32.xlu0 %v41
  %v43 = vpop.xlane.xlu0 %42
  %vm44 = vcmp.eq.f32.partialorder %v41, %v43
  %v45 = vsel %vm44, %v40, inf
  %46 = vmin.xlane.f32.xlu0 %v45
  %v47 = vpop.xlane.xlu0 %46
  %v48 = vcvt.f32.s32 %v47
  %v49 = vcvt.f32.s32 %v43
  %v50 = vshll.u32 %v49, 16
  %v51 = vadd.s32 %v50, %v48
  %vm52 = vcmp.eq.s32.totalorder %v12, %v51
  %v53 = vsel %vm52, -1.0, %v33
  %54 = vmax.xlane.f32.xlu0 %v53
  %v55 = vpop.xlane.xlu0 %54
  %vm56 = vcmp.eq.f32.partialorder %v53, %v55
  %v57 = vsel %vm56, %v12, 128
  %v58 = vand.u32 %v57, 65535
  %v59 = vshra.s32 %v57, 16
  %v60 = vcvt.s32.f32 %v58
  %v61 = vcvt.s32.f32 %v59
  %62 = vmin.xlane.f32.xlu0 %v61
  %v63 = vpop.xlane.xlu0 %62
  %vm64 = vcmp.eq.f32.partialorder %v61, %v63
  %v65 = vsel %vm64, %v60, inf
  %66 = vmin.xlane.f32.xlu0 %v65
  %v67 = vpop.xlane.xlu0 %66
  %v68 = vcvt.f32.s32 %v67
  %v69 = vcvt.f32.s32 %v63
  %v70 = vshll.u32 %v69, 16
  %v71 = vadd.s32 %v70, %v68
  %vm72 = vcmp.eq.s32.totalorder %v12, %v71
  %v73 = vsel %vm72, -1.0, %v53
  %74 = vmax.xlane.f32.xlu0 %v73
  %v75 = vpop.xlane.xlu0 %74
  %vm76 = vcmp.eq.f32.partialorder %v73, %v75
  %v77 = vsel %vm76, %v12, 128
  %v78 = vand.u32 %v77, 65535
  %v79 = vshra.s32 %v77, 16
  %v80 = vcvt.s32.f32 %v78
  %v81 = vcvt.s32.f32 %v79
  %82 = vmin.xlane.f32.xlu0 %v81
  %v83 = vpop.xlane.xlu0 %82
  %vm84 = vcmp.eq.f32.partialorder %v81, %v83
  %v85 = vsel %vm84, %v80, inf
  %86 = vmin.xlane.f32.xlu0 %v85
  %v87 = vpop.xlane.xlu0 %86
  %v88 = vcvt.f32.s32 %v87
  %v89 = vcvt.f32.s32 %v83
  %v90 = vshll.u32 %v89, 16
  %v91 = vadd.s32 %v90, %v88
  %vm92 = vcmp.eq.s32.totalorder %v12, %v91
  %v93 = vsel %vm92, -1.0, %v73
  %94 = vmax.xlane.f32.xlu0 %v93
  %v95 = vpop.xlane.xlu0 %94
  %vm96 = vcmp.eq.f32.partialorder %v93, %v95
  %v97 = vsel %vm96, %v12, 128
  %v98 = vand.u32 %v97, 65535
  %v99 = vshra.s32 %v97, 16
  %v100 = vcvt.s32.f32 %v98
  %v101 = vcvt.s32.f32 %v99
  %102 = vmin.xlane.f32.xlu0 %v101
  %v103 = vpop.xlane.xlu0 %102
  %vm104 = vcmp.eq.f32.partialorder %v101, %v103
  %v105 = vsel %vm104, %v100, inf
  %106 = vmin.xlane.f32.xlu0 %v105
  %v107 = vpop.xlane.xlu0 %106
  %v108 = vcvt.f32.s32 %v107
  %v109 = vcvt.f32.s32 %v103
  %v110 = vshll.u32 %v109, 16
  %v111 = vadd.s32 %v110, %v108
  %v112 = vsel %vm24, %v35, 0.0
  %vm113 = vcmp.eq.s32.totalorder %v12, 4
  %v114 = vcvt.s32.f32 %v51
  %v115 = vsel %vm113, %v114, %v112
  %vm116 = vcmp.eq.s32.totalorder %v12, 1
  %v117 = vsel %vm116, %v55, %v115
  %vm118 = vcmp.eq.s32.totalorder %v12, 5
  %v119 = vcvt.s32.f32 %v71
  %v120 = vsel %vm118, %v119, %v117
  %vm121 = vcmp.eq.s32.totalorder %v12, 2
  %v122 = vsel %vm121, %v75, %v120
  %vm123 = vcmp.eq.s32.totalorder %v12, 6
  %v124 = vcvt.s32.f32 %v91
  %v125 = vsel %vm123, %v124, %v122
  %vm126 = vcmp.eq.s32.totalorder %v12, 3
  %v127 = vsel %vm126, %v95, %v125
  %vm128 = vcmp.eq.s32.totalorder %v12, 7
  %v129 = vcvt.s32.f32 %v111
  %v130 = vsel %vm128, %v129, %v127
  %vm131 = vcmp.eq.s32.totalorder %v12, 8
  %v132 = vsel %vm131, %v32, %v130
  %133 = vst [vmem:[%s2] sm:$0xff] %v132
  // Predicated region
  $region6: #{attribute_post_processor.1} parent=0 // pred_check
    _
  $region7: #{attribute_post_processor.1} parent=0 // pred_check_branch
    %135 = sbr.rel (0) target = $region9
  $region8: #{attribute_post_processor.1} parent=0 // pred_region
    _
  $region9: #{attribute_post_processor.1} parent=0 // pred_fallthru
    _
  // Predicated region
  $region10: #{attribute_post_processor.1} parent=0 // pred_check
    _
  $region11: #{attribute_post_processor.1} parent=0 // pred_check_branch
    %137 = sbr.rel (0) target = $region13
  $region12: #{attribute_post_processor.1} parent=0 // pred_region
    _
  $region13: #{attribute_post_processor.1} parent=0 // pred_fallthru
    _
  // Predicated region
  $region14: #{attribute_post_processor.1} parent=0 // pred_check
    _
  $region15: #{attribute_post_processor.1} parent=0 // pred_check_branch
    %139 = sbr.rel (0) target = $region17
  $region16: #{attribute_post_processor.1} parent=0 // pred_region
    _
  $region17: #{attribute_post_processor.1} parent=0 // pred_fallthru
    _
  // Predicated region
  $region18: #{attribute_post_processor.1} parent=0 // pred_check
    _
  $region19: #{attribute_post_processor.1} parent=0 // pred_check_branch
    %141 = sbr.rel (0) target = $region21
  $region20: #{attribute_post_processor.1} parent=0 // pred_region
    _
  $region21: #{attribute_post_processor.1} parent=0 // pred_fallthru
    _

</llo_original>
